<compile_context>
chip_gen: v5e
topology: v5e:2x2
jax: 0.10.0
libtpu: 0.0.40
codegen_flags: <defaults>
</compile_context>

<pallas_src>
import functools

import jax
import jax.numpy as jnp
from jax.experimental import pallas as pl
from jax.experimental.pallas import tpu as pltpu

IN_FEATURES = 10
OUT_FEATURES = 10

LANE = 128     # TPU vreg lane width  (last dim)
SUBLANE = 8    # TPU vreg sublane count for f32 (second-to-last dim)


def _linear_kernel(x_ref, w_ref, b_ref, o_ref):
    # x_ref: [Bp, 128], w_ref: [128, 128], b_ref: [1, 128], o_ref: [Bp, 128]
    o_ref[...] = (
        jnp.dot(x_ref[...], w_ref[...], preferred_element_type=jnp.float32)
        + b_ref[...]
    ).astype(o_ref.dtype)


@jax.jit
def linear_pallas(x, weight, bias):
    """y = x @ weight.T + bias  (PyTorch nn.Linear semantics).

    x:      [B, IN]
    weight: [OUT, IN]   (PyTorch layout)
    bias:   [OUT]
    returns [B, OUT]
    """
    B, in_f = x.shape
    out_f = weight.shape[0]

    # Pad to a lane-dense, sublane-aligned layout (zeros do not change the math).
    b_pad = max(SUBLANE, ((B + SUBLANE - 1) // SUBLANE) * SUBLANE)
    x_p = jnp.zeros((b_pad, LANE), x.dtype).at[:B, :in_f].set(x)
    w_p = jnp.zeros((LANE, LANE), weight.dtype).at[:in_f, :out_f].set(weight.T)
    b_p = jnp.zeros((1, LANE), bias.dtype).at[0, :out_f].set(bias)

    y_p = pl.pallas_call(
        _linear_kernel,
        out_shape=jax.ShapeDtypeStruct((b_pad, LANE), x.dtype),
        in_specs=[
            pl.BlockSpec(memory_space=pltpu.VMEM),
            pl.BlockSpec(memory_space=pltpu.VMEM),
            pl.BlockSpec(memory_space=pltpu.VMEM),
        ],
        out_specs=pl.BlockSpec(memory_space=pltpu.VMEM),
    )(x_p, w_p, b_p)

    # XLA fuses this slice with the surrounding ops; kernel stays lane-dense.
    return y_p[:B, :out_f]


def init_params(key):
    """Deterministic init matching nn.Linear(10, 10) shapes:
    weight [OUT, IN], bias [OUT]; PyTorch-style uniform(-1/sqrt(fan_in), +)."""
    kw, kb = jax.random.split(key)
    bound = 1.0 / jnp.sqrt(jnp.float32(IN_FEATURES))
    weight = jax.random.uniform(
        kw, (OUT_FEATURES, IN_FEATURES), jnp.float32, -bound, bound
    )
    bias = jax.random.uniform(kb, (OUT_FEATURES,), jnp.float32, -bound, bound)
    return weight, bias


if __name__ == "__main__":
    key = jax.random.PRNGKey(0)
    k_x, k_p = jax.random.split(key)

    batch = 8
    x = jax.random.normal(k_x, (batch, IN_FEATURES), jnp.float32)
    weight, bias = init_params(k_p)

    y = linear_pallas(x, weight, bias)
    jax.block_until_ready(y)

    # Reference check against plain JAX (same math as torch nn.Linear).
    y_ref = x @ weight.T + bias
    assert y.shape == (batch, OUT_FEATURES)
    assert jnp.allclose(y, y_ref, atol=1e-5, rtol=1e-5), "mismatch vs reference"

    print("KERNEL_OK")
</pallas_src>

<mosaic_0001>
module attributes {stable_mosaic.version = 11 : i64} {
  func.func @_linear_kernel(%arg0: memref<8x128xf32, #tpu.memory_space<vmem>>, %arg1: memref<128x128xf32, #tpu.memory_space<vmem>>, %arg2: memref<1x128xf32, #tpu.memory_space<vmem>>, %arg3: memref<8x128xf32, #tpu.memory_space<vmem>>) attributes {dimension_semantics = [], scalar_prefetch = 0 : i64, scratch_operands = 0 : i64, tpu.core_type = #tpu.core_type<tc>} {
    %c0 = arith.constant 0 : index
    %c0_0 = arith.constant 0 : index
    %0 = vector.load %arg0[%c0, %c0_0] : memref<8x128xf32, #tpu.memory_space<vmem>>, vector<8x128xf32>
    %c0_1 = arith.constant 0 : index
    %c0_2 = arith.constant 0 : index
    %1 = vector.load %arg1[%c0_1, %c0_2] : memref<128x128xf32, #tpu.memory_space<vmem>>, vector<128x128xf32>
    %cst = arith.constant dense<0.000000e+00> : vector<8x128xf32>
    %2 = tpu.matmul %0, %1, %cst {dimension_numbers = #tpu.dot_dimension_numbers<[1], [0], [0], [1], [0, 0, 1, 1], [], []>} : vector<8x128xf32>, vector<128x128xf32>, vector<8x128xf32> -> vector<8x128xf32>
    %c0_3 = arith.constant 0 : index
    %c0_4 = arith.constant 0 : index
    %3 = vector.load %arg2[%c0_3, %c0_4] : memref<1x128xf32, #tpu.memory_space<vmem>>, vector<1x128xf32>
    %4 = vector.broadcast %3 : vector<1x128xf32> to vector<8x128xf32>
    %5 = arith.addf %2, %4 : vector<8x128xf32>
    %c0_5 = arith.constant 0 : index
    %c0_6 = arith.constant 0 : index
    %6 = vector.load %arg3[%c0_5, %c0_6] : memref<8x128xf32, #tpu.memory_space<vmem>>, vector<8x128xf32>
    tpu.vector_store %arg3[%c0_5, %c0_6], %5 {strides = array<i32>} : memref<8x128xf32, #tpu.memory_space<vmem>>, vector<8x128xf32>,
    return
  }
}

</mosaic_0001>

<llo_original>
// kernel: linear_pallas.1
$region0: #{linear_pallas.1}
  #allocation0 [shape = 'u32[]', space=smem, size = 0x4, offset = 0x4, fixed_abs, tag = 'smem constant byte address 0x4 - core index']
  #allocation1 [shape = 'u32[72,128]{1,0:T(1,128)}', space=vmem, size = 0x9000, scoped, tag = 'internal scratch']
  %s0 = inlined_call_operand.vmem [shape: f32[8,128], index: 0, kind: input, shape index: {}]
  %s1 = inlined_call_operand.vmem [shape: f32[128,128], index: 1, kind: input, shape index: {}]
  %s2 = inlined_call_operand.vmem [shape: f32[1,128], index: 2, kind: input, shape index: {}]
  %s3 = inlined_call_operand.hbm [shape: f32[8,128], index: 3, kind: output, shape index: {}]
  %s4 = sld [smem:[#allocation0]]
  $region22: #{linear_pallas.1} parent=0
    _
  %s6 = ssub.s32 1, %s4
  %s7 = scalar_select 0, %s6, %s4
  $region1: #{linear_pallas.1} parent=0
    #allocation2 [shape = 'u8[4096]{0}', space=vmem, size = 0x1000, scoped, tag = 'output window, operand 0, single buffered']
    #allocation3 [shape = 's32[1]{0}', space=sflag, size = 0x4, scoped, tag = 'scoped memory for linear_pallas.1']
    %8 = vsyncpa [#allocation3], 0
    // Predicated region
    $region2: #{linear_pallas.1} parent=1 // pred_check
      _
    $region3: #{linear_pallas.1} parent=1 // pred_check_branch
      %10 = sbr.rel (0) target = $region5
    $region4: #{linear_pallas.1} parent=1 // pred_region
      _
    $region5: #{linear_pallas.1} parent=1 // pred_fallthru
      _
    // Predicated region
    $region6: #{linear_pallas.1} parent=1 // pred_check
      _
    $region7: #{linear_pallas.1} parent=1 // pred_check_branch
      %12 = sbr.rel (0) target = $region9
    $region8: #{linear_pallas.1} parent=1 // pred_region
      _
    $region9: #{linear_pallas.1} parent=1 // pred_fallthru
      _
    // Predicated region
    $region10: #{linear_pallas.1} parent=1 // pred_check
      _
    $region11: #{linear_pallas.1} parent=1 // pred_check_branch
      %14 = sbr.rel (0) target = $region13
    $region12: #{linear_pallas.1} parent=1 // pred_region
      _
    $region13: #{linear_pallas.1} parent=1 // pred_fallthru
      _
    %v15 = vld [vmem:[%s0] sm:$0xff]
    %v16 = vld [vmem:[%s1] sm:$0xff]
    %v17 = vld [vmem:[%s1 + $0x8] sm:$0xff]
    %v18 = vld [vmem:[%s1 + $0x10] sm:$0xff]
    %v19 = vld [vmem:[%s1 + $0x18] sm:$0xff]
    %v20 = vld [vmem:[%s1 + $0x20] sm:$0xff]
    %v21 = vld [vmem:[%s1 + $0x28] sm:$0xff]
    %v22 = vld [vmem:[%s1 + $0x30] sm:$0xff]
    %v23 = vld [vmem:[%s1 + $0x38] sm:$0xff]
    %v24 = vld [vmem:[%s1 + $0x40] sm:$0xff]
    %v25 = vld [vmem:[%s1 + $0x48] sm:$0xff]
    %v26 = vld [vmem:[%s1 + $0x50] sm:$0xff]
    %v27 = vld [vmem:[%s1 + $0x58] sm:$0xff]
    %v28 = vld [vmem:[%s1 + $0x60] sm:$0xff]
    %v29 = vld [vmem:[%s1 + $0x68] sm:$0xff]
    %v30 = vld [vmem:[%s1 + $0x70] sm:$0xff]
    %v31 = vld [vmem:[%s1 + $0x78] sm:$0xff]
    %v32 = vld [vmem:[%s2] sm:$0x1]
    %v34 = vperm.slane %v32, 0
    %36 = vmatpush.msra.mxu0 %v31
    %37 = vmatpush.msra.mxu0 %v30
    %38 = vmatpush.msra.mxu0 %v29
    %39 = vmatpush.msra.mxu0 %v28
    %40 = vmatpush.msra.mxu0 %v27
    %41 = vmatpush.msra.mxu0 %v26
    %42 = vmatpush.msra.mxu0 %v25
    %43 = vmatpush.msra.mxu0 %v24
    %44 = vmatpush.msra.mxu0 %v23
    %45 = vmatpush.msra.mxu0 %v22
    %46 = vmatpush.msra.mxu0 %v21
    %47 = vmatpush.msra.mxu0 %v20
    %48 = vmatpush.msra.mxu0 %v19
    %49 = vmatpush.msra.mxu0 %v18
    %50 = vmatpush.msra.mxu0 %v17
    %51 = vmatpush.msra.mxu0 %v16
    %52 = vmatmul.f32.gmra.mxu0 %v15
    %v53 = vpop.f32.mrf.mxu0
    %v54 = vadd.f32 %v34, %v53
    %55 = vdwg.mxu0
    %56 = vst [vmem:[#allocation2] sm:$0xff] %v54
    // Predicated region
    $region14: #{linear_pallas.1} parent=1 // pred_check
      _
    $region15: #{linear_pallas.1} parent=1 // pred_check_branch
      %58 = sbr.rel (0) target = $region17
    $region16: #{linear_pallas.1} parent=1 // pred_region
      %60 = vsyncadd [#allocation3], 0
      %s62 = sshll.u32 [#allocation2], 4
      %s63 = int_to_ptr.vmem [resolvable:$true] %s62
      %s64 = sshll.u32 %s3, 4
      %s65 = int_to_ptr.hbm [resolvable:$true] %s64
      %67 = dma.vmem_to_hbm [thread:$0]  %s63, 128, %s65, [#allocation3]
    $region17: #{linear_pallas.1} parent=1 // pred_fallthru
      _
    // Predicated region
    $region18: #{linear_pallas.1} parent=1 // pred_check
      _
    $region19: #{linear_pallas.1} parent=1 // pred_check_branch
      %69 = sbr.rel (0) target = $region21
    $region20: #{linear_pallas.1} parent=1 // pred_region
      %71 = dma.done [#allocation3], 128
    $region21: #{linear_pallas.1} parent=1 // pred_fallthru
      _
    %72 = vsyncpa [#allocation3], 1

</llo_original>
